<compile_context>
chip_gen: v7x
topology: tpu7x:2x2x1
jax: 0.10.0
libtpu: 0.0.40
codegen_flags: <defaults>
</compile_context>

<pallas_src>
import functools

import jax
import jax.numpy as jnp
from jax.experimental import pallas as pl
from jax.experimental.pallas import tpu as pltpu

_LANE = 128


def _round_up(v: int, m: int) -> int:
    return (v + m - 1) // m * m


def _vmem_capacity_bytes() -> int:
    """Physical VMEM of the current chip; conservative fallback if unknown."""
    try:
        return int(pltpu.get_tpu_info().vmem_capacity_bytes)
    except Exception:
        return 64 << 20  # smallest across v5e/v6e/v7x (v7x per-TC)


def _default_target_bytes() -> int:
    """~8 MiB input tiles on 64 MiB chips (v7x), ~16 MiB on 128 MiB chips."""
    cap = _vmem_capacity_bytes()
    return int(min(16 << 20, max(8 << 20, cap // 8)))


def _max_over_time_kernel(x_ref, o_ref, *, tt, t_total, fill):
    """One (BB, TT, CC) tile -> running max into the resident (BB, CC) output."""
    k = pl.program_id(2)          # time-tile index (reduction axis, last)
    n_t = pl.num_programs(2)
    rem = t_total % tt            # static: size of the final partial time tile

    def accum(red):
        @pl.when(k == 0)
        def _():
            o_ref[...] = red      # first tile: write directly, no -inf init

        @pl.when(k > 0)
        def _():
            o_ref[...] = jnp.maximum(o_ref[...], red)

    if rem == 0:
        # All time tiles are full: plain load + max, nothing else on hot path.
        accum(jnp.max(x_ref[...], axis=1))
    else:
        # rem != 0 implies n_t >= 2, so the masked tile is never also k == 0's
        # "direct write" conflict partner (k == n_t - 1 > 0).
        @pl.when(k < n_t - 1)
        def _():
            accum(jnp.max(x_ref[...], axis=1))

        @pl.when(k == n_t - 1)
        def _():
            # Final partial tile: mask padded steps to the identity of max so
            # out-of-bounds garbage cannot leak into the result.
            x = x_ref[...]
            t_idx = jax.lax.broadcasted_iota(jnp.int32, (1, tt, 1), 1)
            x = jnp.where(t_idx < rem, x, jnp.asarray(fill, dtype=x.dtype))
            accum(jnp.max(x, axis=1))


def _choose_tiles(B, T, C, itemsize, target_bytes):
    """Pick (BB, TT, CC): ~target_bytes input tiles, sublane/lane aligned."""
    sub = max(8, 32 // itemsize)   # sublane pack: 8 f32, 16 bf16, 32 int8

    # --- batch block (kept a multiple of `sub` so output stores stay dense).
    BB = B if B <= sub else sub

    # --- time block with full C first.
    row_bytes = C * itemsize
    tt = target_bytes // max(1, BB * row_bytes)
    if tt >= T:
        TT = T
        if B > BB:
            # Whole time axis fits; grow the batch block to fill the budget.
            bb = (target_bytes // max(1, T * row_bytes)) // sub * sub
            BB = B if bb >= B else max(BB, bb)
    else:
        TT = max(sub, (tt // sub) * sub)
        # Balance the split so the last time tile isn't nearly empty.
        n_t = pl.cdiv(T, TT)
        TT = min(T, _round_up(pl.cdiv(T, n_t), sub))

    # --- channel block.
    CC = C
    nb = pl.cdiv(B, BB)
    can_split_c = (C % _LANE == 0) and (C >= 2 * _LANE)
    tile_bytes = BB * TT * C * itemsize
    if can_split_c:
        n_c = 1
        if tile_bytes > target_bytes:
            # Even the minimum time tile is too big (very wide C): bound VMEM.
            n_c = pl.cdiv(tile_bytes, target_bytes)
        if nb == 1 and n_c < 2:
            # Only one batch block: split C so a second parallel grid step
            # exists (keeps v7x's 2nd TensorCore busy; harmless on v5e/v6e).
            n_c = 2
        if n_c > 1:
            CC = min(C, max(_LANE, _round_up(pl.cdiv(C, n_c), _LANE)))

    return int(BB), int(TT), int(CC)


def max_over_time_pool(x: jax.Array, *, target_block_bytes: int | None = None) -> jax.Array:
    """Max over axis 1 of a (B, T, C) array -> (B, C). Same as torch.max(x, 1)[0]."""
    assert x.ndim == 3, "expected (batch, time, channels)"
    B, T, C = x.shape
    itemsize = x.dtype.itemsize

    if target_block_bytes is None:
        target_block_bytes = _default_target_bytes()

    BB, TT, CC = _choose_tiles(B, T, C, itemsize, target_block_bytes)
    # Reduction (time) axis last; batch and channel axes are parallel.
    grid = (pl.cdiv(B, BB), pl.cdiv(C, CC), pl.cdiv(T, TT))

    if jnp.issubdtype(x.dtype, jnp.floating):
        fill = float("-inf")
    else:
        fill = int(jnp.iinfo(x.dtype).min)

    kernel = functools.partial(_max_over_time_kernel, tt=TT, t_total=T, fill=fill)

    # Double-buffered input tile + resident/double-buffered output block, with
    # headroom; cap at ~3/4 of this generation's physical VMEM.
    in_tile_bytes = BB * TT * CC * itemsize
    out_tile_bytes = BB * CC * itemsize
    vmem_cap = max(32 << 20, (_vmem_capacity_bytes() * 3) // 4)
    vmem_limit = int(min(max(4 * (in_tile_bytes + out_tile_bytes), 16 << 20), vmem_cap))

    # Partial last batch/channel blocks are handled by Pallas (out-of-bounds
    # rows/lanes dropped on write; garbage channel columns never mix across
    # lanes since the reduction is along time). Partial last time block is
    # masked in-kernel.
    return pl.pallas_call(
        kernel,
        out_shape=jax.ShapeDtypeStruct((B, C), x.dtype),
        grid_spec=pltpu.PrefetchScalarGridSpec(
            num_scalar_prefetch=0,
            grid=grid,
            in_specs=[pl.BlockSpec((BB, TT, CC), lambda b, c, k: (b, k, c))],
            out_specs=pl.BlockSpec((BB, CC), lambda b, c, k: (b, c)),
        ),
        compiler_params=pltpu.CompilerParams(
            dimension_semantics=("parallel", "parallel", "arbitrary"),
            vmem_limit_bytes=vmem_limit,
        ),
        cost_estimate=pl.CostEstimate(
            flops=B * T * C,
            transcendentals=0,
            bytes_accessed=(B * T * C + B * C) * itemsize,
        ),
    )(x)


if __name__ == "__main__":
    key = jax.random.PRNGKey(0)
    k1, k2, k3 = jax.random.split(key, 3)

    # Case 1: small shape consistent with the module: batch=2, time=16, C=128.
    x1 = jax.random.normal(k1, (2, 16, 128), dtype=jnp.float32)
    out1 = jax.block_until_ready(max_over_time_pool(x1))
    ref1 = jnp.max(x1, axis=1)
    assert out1.shape == ref1.shape == (2, 128)
    assert jnp.array_equal(out1, ref1), "mismatch vs reference (case 1)"

    # Case 2: multi-tile time reduction with a masked partial last tile
    # (T=37 not a multiple of TT); tiny target forces tiling.
    x2 = jax.random.normal(k2, (16, 37, 128), dtype=jnp.float32)
    out2 = jax.block_until_ready(max_over_time_pool(x2, target_block_bytes=32 * 1024))
    ref2 = jnp.max(x2, axis=1)
    assert out2.shape == ref2.shape == (16, 128)
    assert jnp.array_equal(out2, ref2), "mismatch vs reference (case 2)"

    # Case 3: single batch block -> channel axis auto-split into 2 parallel
    # blocks (exercises the 3-axis grid used for v7x dual-TC utilization).
    x3 = jax.random.normal(k3, (2, 20, 256), dtype=jnp.float32)
    out3 = jax.block_until_ready(max_over_time_pool(x3))
    ref3 = jnp.max(x3, axis=1)
    assert out3.shape == ref3.shape == (2, 256)
    assert jnp.array_equal(out3, ref3), "mismatch vs reference (case 3)"

    print("KERNEL_OK")
</pallas_src>

<mosaic_0001>
module attributes {stable_mosaic.version = 11 : i64} {
  func.func @_max_over_time_kernel(%arg0: i32, %arg1: i32, %arg2: i32, %arg3: memref<2x16x128xf32, #tpu.memory_space<vmem>>, %arg4: memref<2x128xf32, #tpu.memory_space<vmem>>) attributes {dimension_semantics = [#tpu.dimension_semantics<parallel>, #tpu.dimension_semantics<parallel>, #tpu.dimension_semantics<arbitrary>], iteration_bounds = array<i64: 1, 1, 1>, scalar_prefetch = 0 : i64, scratch_operands = 0 : i64, tpu.core_type = #tpu.core_type<tc>, window_params = [{transform_indices = @transform_0, window_bounds = array<i64: 2, 16, 128>}, {transform_indices = @transform_1, window_bounds = array<i64: 2, 128>}]} {
    %c0 = arith.constant 0 : index
    %c0_0 = arith.constant 0 : index
    %c0_1 = arith.constant 0 : index
    %0 = vector.load %arg3[%c0, %c0_0, %c0_1] : memref<2x16x128xf32, #tpu.memory_space<vmem>>, vector<2x16x128xf32>
    %cst = arith.constant dense<0xFF800000> : vector<2x128xf32>
    %1 = vector.multi_reduction <maximumf>, %0, %cst [1] : vector<2x16x128xf32> to vector<2x128xf32>
    %c0_i32 = arith.constant 0 : i32
    %2 = arith.cmpi eq, %arg2, %c0_i32 : i32
    %3 = arith.extui %2 : i1 to i32
    %c0_i32_2 = arith.constant 0 : i32
    %4 = arith.cmpi ne, %3, %c0_i32_2 : i32
    scf.if %4 {
      %c0_5 = arith.constant 0 : index
      %c0_6 = arith.constant 0 : index
      %8 = vector.load %arg4[%c0_5, %c0_6] : memref<2x128xf32, #tpu.memory_space<vmem>>, vector<2x128xf32>
      tpu.vector_store %arg4[%c0_5, %c0_6], %1 {strides = array<i32>} : memref<2x128xf32, #tpu.memory_space<vmem>>, vector<2x128xf32>,
    } else {
    }
    %c0_i32_3 = arith.constant 0 : i32
    %5 = arith.cmpi sgt, %arg2, %c0_i32_3 : i32
    %6 = arith.extui %5 : i1 to i32
    %c0_i32_4 = arith.constant 0 : i32
    %7 = arith.cmpi ne, %6, %c0_i32_4 : i32
    scf.if %7 {
      %c0_5 = arith.constant 0 : index
      %c0_6 = arith.constant 0 : index
      %8 = vector.load %arg4[%c0_5, %c0_6] : memref<2x128xf32, #tpu.memory_space<vmem>>, vector<2x128xf32>
      %9 = arith.maximumf %8, %1 : vector<2x128xf32>
      %c0_7 = arith.constant 0 : index
      %c0_8 = arith.constant 0 : index
      %10 = vector.load %arg4[%c0_7, %c0_8] : memref<2x128xf32, #tpu.memory_space<vmem>>, vector<2x128xf32>
      tpu.vector_store %arg4[%c0_7, %c0_8], %9 {strides = array<i32>} : memref<2x128xf32, #tpu.memory_space<vmem>>, vector<2x128xf32>,
    } else {
    }
    return
  }
  func.func @transform_0(%arg0: i32, %arg1: i32, %arg2: i32) -> (i32, i32, i32) {
    %c0_i32 = arith.constant 0 : i32
    return %arg0, %arg2, %arg1 : i32, i32, i32
  }
  func.func @transform_1(%arg0: i32, %arg1: i32, %arg2: i32) -> (i32, i32) {
    %c0_i32 = arith.constant 0 : i32
    return %arg0, %arg1 : i32, i32
  }
}

</mosaic_0001>

<llo_original>
// kernel: tpu_custom_call.1
$region0: #{tpu_custom_call.1}
  #allocation0 [shape = 'u32[]', space=smem, size = 0x4, offset = 0x4, fixed_abs, tag = 'smem constant byte address 0x4 - core index']
  #allocation1 [shape = 'u32[144,128]{1,0:T(1,128)}', space=vmem, size = 0x12000, scoped, tag = 'internal scratch']
  %s0 = inlined_call_operand.hbm [shape: f32[2,16,128], index: 0, kind: input, shape index: {}]
  %s1 = inlined_call_operand.hbm [shape: f32[2,128], index: 1, kind: output, shape index: {}]
  %s2 = sld [smem:[#allocation0]]
  $region26: #{tpu_custom_call.1} parent=0
    _
  %s4 = ssub.s32 1, %s2
  %s5 = scalar_select 0, %s4, %s2
  $region1: #{tpu_custom_call.1} parent=0
    #allocation2 [shape = 'u8[16384]{0}', space=vmem, size = 0x4000, scoped, tag = 'input window, operand 0, single buffered']
    #allocation3 [shape = 's32[1]{0}', space=sflag, size = 0x4, scoped, tag = 'scoped memory for tpu_custom_call.1']
    #allocation4 [shape = 's32[1]{0}', space=sflag, size = 0x4, scoped, tag = 'scoped memory for tpu_custom_call.1']
    #allocation5 [shape = 'u8[1024]{0}', space=vmem, size = 0x400, scoped, tag = 'output window, operand 0, single buffered']
    %6 = vsyncpa [#allocation3], 0
    %7 = vsyncpa [#allocation4], 0
    // Predicated region
    $region2: #{tpu_custom_call.1} parent=1 // pred_check
      _
    $region3: #{tpu_custom_call.1} parent=1 // pred_check_branch
      %9 = sbr.rel (0) target = $region5
    $region4: #{tpu_custom_call.1} parent=1 // pred_region
      %s11 = ssub.s32 512, 512
      %12 = vsyncadd [#allocation3], %s11
      %s13 = sshll.u32 [#allocation2], 4
      %s14 = int_to_ptr.vmem [resolvable:$true] %s13
      %19 = dma.hbm_to_vmem [thread:$0]  %s0, 512, %s14, [#allocation3], 128, 128, 8
    $region5: #{tpu_custom_call.1} parent=1 // pred_fallthru
      _
    // Predicated region
    $region6: #{tpu_custom_call.1} parent=1 // pred_check
      _
    $region7: #{tpu_custom_call.1} parent=1 // pred_check_branch
      %21 = sbr.rel (0) target = $region9
    $region8: #{tpu_custom_call.1} parent=1 // pred_region
      %22 = dma.done [#allocation3], 512
    $region9: #{tpu_custom_call.1} parent=1 // pred_fallthru
      _
    %v23 = vld [vmem:[#allocation2] sm:$0xff]
    %v24 = vld [vmem:[#allocation2 + $0x8] sm:$0xff]
    %v25 = vld [vmem:[#allocation2 + $0x10] sm:$0xff]
    %v26 = vld [vmem:[#allocation2 + $0x18] sm:$0xff]
    %v27 = vmax.f32 %v23, %v24
    %v28 = vrot.slane %v27, 4
    %v29 = vmax.f32 %v27, %v28
    %v30 = vrot.slane %v29, 2
    %v31 = vmax.f32 %v29, %v30
    %v32 = vrot.slane %v31, 1
    %v33 = vmax.f32 %v31, %v32
    %v34 = vmax.f32 %v25, %v26
    %v35 = vrot.slane %v34, 4
    %v36 = vmax.f32 %v34, %v35
    %v37 = vrot.slane %v36, 2
    %v38 = vmax.f32 %v36, %v37
    %v39 = vrot.slane %v38, 1
    %v40 = vmax.f32 %v38, %v39
    %p41 = scmp.eq.s32.totalorder 0, 0
    // Predicated region
    $region10: #{tpu_custom_call.1} parent=1 // pred_check
      %p42 = pneg %p41
    $region11: #{tpu_custom_call.1} parent=1 // pred_check_branch
      %44 = sbr.rel (%p42) target = $region13
    $region12: #{tpu_custom_call.1} parent=1 // pred_region
      %vm47 = vcmask 1041409
      %v48 = vsel %vm47, %v40, %v33
      %50 = vst [vmem:[#allocation5] sm:$0x3] %v48
    $region13: #{tpu_custom_call.1} parent=1 // pred_fallthru
      _
    %p51 = scmp.gt.s32.totalorder 0, 0
    // Predicated region
    $region14: #{tpu_custom_call.1} parent=1 // pred_check
      %p52 = pneg %p51
    $region15: #{tpu_custom_call.1} parent=1 // pred_check_branch
      %54 = sbr.rel (%p52) target = $region17
    $region16: #{tpu_custom_call.1} parent=1 // pred_region
      %v55 = vld [vmem:[#allocation5] sm:$0x3]
      %vm58 = vcmask 1041409
      %v59 = vsel %vm58, %v40, %v33
      %v61 = vmax.f32 %v55, %v59
      %62 = vst [vmem:[#allocation5] sm:$0x3] %v61
    $region17: #{tpu_custom_call.1} parent=1 // pred_fallthru
      _
    // Predicated region
    $region18: #{tpu_custom_call.1} parent=1 // pred_check
      _
    $region19: #{tpu_custom_call.1} parent=1 // pred_check_branch
      %64 = sbr.rel (0) target = $region21
    $region20: #{tpu_custom_call.1} parent=1 // pred_region
      %s66 = ssub.s32 32, 32
      %67 = vsyncadd [#allocation4], %s66
      %s69 = sshll.u32 [#allocation5], 4
      %s70 = int_to_ptr.vmem [resolvable:$true] %s69
      %72 = dma.vmem_to_hbm [thread:$0]  %s70, 32, %s1, [#allocation4]
    $region21: #{tpu_custom_call.1} parent=1 // pred_fallthru
      _
    // Predicated region
    $region22: #{tpu_custom_call.1} parent=1 // pred_check
      _
    $region23: #{tpu_custom_call.1} parent=1 // pred_check_branch
      %74 = sbr.rel (0) target = $region25
    $region24: #{tpu_custom_call.1} parent=1 // pred_region
      %75 = dma.done [#allocation4], 32
    $region25: #{tpu_custom_call.1} parent=1 // pred_fallthru
      _
    %76 = vsyncpa [#allocation3], 1
    %77 = vsyncpa [#allocation4], 1

</llo_original>
